<compile_context>
chip_gen: v7x
topology: tpu7x:2x2x1
jax: 0.10.0
libtpu: 0.0.40
codegen_flags: <defaults>
</compile_context>

<pallas_src>
import math
from functools import lru_cache, partial

import numpy as np
import jax
import jax.numpy as jnp
from jax.experimental import pallas as pl
from jax.experimental.pallas import tpu as pltpu


POOL_SIZES = {'resnet50': [12, 6, 4, 3, 1]}


@lru_cache(maxsize=None)
def _pool_matrix_t_np(h: int, w: int, s: int) -> np.ndarray:
    """(H*W, S*S) transposed AdaptiveAvgPool2d(s) matrix, built on host & cached."""
    def weights_1d(in_size, out_size):
        m = np.zeros((out_size, in_size), dtype=np.float32)
        for i in range(out_size):
            start = (i * in_size) // out_size
            end = math.ceil((i + 1) * in_size / out_size)
            m[i, start:end] = 1.0 / float(end - start)
        return m

    ph = weights_1d(h, s)                                  # (s, h)
    pw = weights_1d(w, s)                                  # (s, w)
    p = np.einsum('ih,jw->ijhw', ph, pw).reshape(s * s, h * w)
    return np.ascontiguousarray(p.T)                       # (h*w, s*s)


def _choose_c_tile(c: int, dtype) -> int:
    """Channel tile: largest multiple-of-8 divisor of C <= target (or full C)."""
    target = 1024 if dtype == jnp.bfloat16 else 512
    if c <= target:
        return c
    for tc in range(target - (target % 8), 0, -8):
        if c % tc == 0:
            return tc
    return c  # no suitable divisor: fall back to full channel dim


def _pool_kernel(x_ref, pt_ref, o_ref):
    # x_ref: (1, TC, H*W), pt_ref: (H*W, S*S), o_ref: (1, TC, S*S)
    o_ref[0] = jnp.dot(
        x_ref[0], pt_ref[...], preferred_element_type=jnp.float32
    ).astype(o_ref.dtype)


@partial(jax.jit, static_argnums=(2,))
def adaptive_avg_pool2d_pallas(x_nchw: jnp.ndarray, pool_mat_t: jnp.ndarray,
                               out_size: int) -> jnp.ndarray:
    """AdaptiveAvgPool2d(out_size) on an NCHW tensor via a Pallas MXU matmul."""
    n, c, h, w = x_nchw.shape
    s = out_size
    hw, ss = pool_mat_t.shape
    x_flat = x_nchw.reshape(n, c, hw)          # free reshape, no transpose
    tc = _choose_c_tile(c, x_nchw.dtype)

    itemsize = x_flat.dtype.itemsize
    cost = pl.CostEstimate(
        flops=int(2 * n * c * hw * ss),
        transcendentals=0,
        bytes_accessed=int(n * c * hw * itemsize            # input
                           + n * c * ss * itemsize          # output
                           + hw * ss * pool_mat_t.dtype.itemsize),  # P_T
    )

    out = pl.pallas_call(
        _pool_kernel,
        out_shape=jax.ShapeDtypeStruct((n, c, ss), x_nchw.dtype),
        grid_spec=pl.GridSpec(
            grid=(n, c // tc),
            in_specs=[
                pl.BlockSpec((1, tc, hw), lambda i, j: (i, j, 0)),
                pl.BlockSpec((hw, ss), lambda i, j: (0, 0)),
            ],
            out_specs=pl.BlockSpec((1, tc, ss), lambda i, j: (i, j, 0)),
        ),
        compiler_params=pltpu.CompilerParams(
            dimension_semantics=("parallel", "parallel")),
        cost_estimate=cost,
    )(x_flat, pool_mat_t)

    # (N, C, S*S) -> (N, C, S, S): free reshape, matches nn.AdaptiveAvgPool2d.
    return out.reshape(n, c, s, s)


class MultiAvgPoolingPallas:
    """JAX/Pallas port of easycv MultiAvgPooling (pool_type='adaptive')."""

    def __init__(self, pool_type='adaptive', in_indices=(0,), backbone='resnet50'):
        assert pool_type in ['adaptive', 'specified']
        # TODO(synk): only the 'adaptive' branch (the module default) is
        # implemented; the 'specified' AvgPool2d branch is unused by defaults.
        assert pool_type == 'adaptive'
        self.out_sizes = [POOL_SIZES[backbone][l] for l in in_indices]

    def __call__(self, x):
        assert isinstance(x, (list, tuple))
        outs = []
        for out_size, xx in zip(self.out_sizes, x):
            n, c, h, w = xx.shape
            p_t = _pool_matrix_t_np(h, w, out_size)
            # bf16 P on bf16 inputs -> fast MXU path on v6e/v7x, half P VMEM.
            # (Adaptive-pool weights for typical shapes are exact in bf16.)
            mat_dtype = jnp.bfloat16 if xx.dtype == jnp.bfloat16 else jnp.float32
            pool_mat_t = jnp.asarray(p_t, dtype=mat_dtype)
            outs.append(adaptive_avg_pool2d_pallas(xx, pool_mat_t, out_size))
        return outs


def _reference(x_nchw, out_size):
    n, c, h, w = x_nchw.shape
    p_t = jnp.asarray(_pool_matrix_t_np(h, w, out_size))   # (h*w, s*s) f32
    xf = x_nchw.astype(jnp.float32).reshape(n, c, h * w)
    o = jnp.einsum('nck,ko->nco', xf, p_t)
    return o.reshape(n, c, out_size, out_size)


if __name__ == "__main__":
    key = jax.random.PRNGKey(0)
    # Small NCHW input consistent with the module (single in_index -> one tensor).
    x = jax.random.normal(key, (2, 4, 16, 16), dtype=jnp.float32)

    model = MultiAvgPoolingPallas(pool_type='adaptive', in_indices=(0,),
                                  backbone='resnet50')
    out = jax.block_until_ready(model([x])[0])
    ref = _reference(x, model.out_sizes[0])
    assert out.shape == (2, 4, 12, 12), out.shape
    assert jnp.allclose(out, ref, atol=1e-5, rtol=1e-5)

    # bf16 path (bf16 pool matrix, f32 accumulation).
    xb = jax.random.normal(jax.random.PRNGKey(1), (2, 8, 16, 16),
                           dtype=jnp.bfloat16)
    outb = jax.block_until_ready(model([xb])[0])
    refb = _reference(xb, model.out_sizes[0])
    assert outb.shape == (2, 8, 12, 12), outb.shape
    assert jnp.allclose(outb.astype(jnp.float32), refb, atol=5e-2, rtol=5e-2)

    print("KERNEL_OK")
</pallas_src>

<mosaic_0001>
module attributes {stable_mosaic.version = 11 : i64} {
  func.func @_pool_kernel(%arg0: i32, %arg1: i32, %arg2: memref<1x4x256xf32, #tpu.memory_space<vmem>>, %arg3: memref<256x144xf32, #tpu.memory_space<vmem>>, %arg4: memref<1x4x144xf32, #tpu.memory_space<vmem>>) attributes {dimension_semantics = [#tpu.dimension_semantics<parallel>, #tpu.dimension_semantics<parallel>], iteration_bounds = array<i64: 2, 1>, scalar_prefetch = 0 : i64, scratch_operands = 0 : i64, tpu.core_type = #tpu.core_type<tc>, window_params = [{transform_indices = @transform_0, window_bounds = array<i64: 1, 4, 256>}, {pipeline_mode = #tpu.pipeline_mode<synchronous>, transform_indices = @transform_1, window_bounds = array<i64: 256, 144>}, {transform_indices = @transform_2, window_bounds = array<i64: 1, 4, 144>}]} {
    %c0 = arith.constant 0 : index
    %c0_0 = arith.constant 0 : index
    %c0_1 = arith.constant 0 : index
    %0 = vector.load %arg2[%c0, %c0_0, %c0_1] : memref<1x4x256xf32, #tpu.memory_space<vmem>>, vector<1x4x256xf32>
    %1 = vector.shape_cast %0 : vector<1x4x256xf32> to vector<4x256xf32>
    %c0_2 = arith.constant 0 : index
    %c0_3 = arith.constant 0 : index
    %2 = vector.load %arg3[%c0_2, %c0_3] : memref<256x144xf32, #tpu.memory_space<vmem>>, vector<256x144xf32>
    %cst = arith.constant dense<0.000000e+00> : vector<4x144xf32>
    %3 = tpu.matmul %1, %2, %cst {dimension_numbers = #tpu.dot_dimension_numbers<[1], [0], [0], [1], [0, 0, 1, 1], [], []>} : vector<4x256xf32>, vector<256x144xf32>, vector<4x144xf32> -> vector<4x144xf32>
    %c0_4 = arith.constant 0 : index
    %c0_5 = arith.constant 0 : index
    %c0_6 = arith.constant 0 : index
    %4 = vector.load %arg4[%c0_4, %c0_5, %c0_6] : memref<1x4x144xf32, #tpu.memory_space<vmem>>, vector<1x4x144xf32>
    %5 = vector.shape_cast %4 : vector<1x4x144xf32> to vector<4x144xf32>
    %6 = vector.shape_cast %3 : vector<4x144xf32> to vector<1x4x144xf32>
    tpu.vector_store %arg4[%c0_4, %c0_5, %c0_6], %6 {strides = array<i32>} : memref<1x4x144xf32, #tpu.memory_space<vmem>>, vector<1x4x144xf32>,
    return
  }
  func.func @transform_0(%arg0: i32, %arg1: i32) -> (i32, i32, i32) {
    %c0_i32 = arith.constant 0 : i32
    %c0_i32_0 = arith.constant 0 : i32
    return %arg0, %arg1, %c0_i32 : i32, i32, i32
  }
  func.func @transform_1(%arg0: i32, %arg1: i32) -> (i32, i32) {
    %c0_i32 = arith.constant 0 : i32
    %c0_i32_0 = arith.constant 0 : i32
    %c0_i32_1 = arith.constant 0 : i32
    return %c0_i32, %c0_i32_0 : i32, i32
  }
  func.func @transform_2(%arg0: i32, %arg1: i32) -> (i32, i32, i32) {
    %c0_i32 = arith.constant 0 : i32
    %c0_i32_0 = arith.constant 0 : i32
    return %arg0, %arg1, %c0_i32 : i32, i32, i32
  }
}

</mosaic_0001>

<llo_original>
// kernel: adaptive_avg_pool2d_pallas.1
$region0: #{adaptive_avg_pool2d_pallas.1}
  #allocation0 [shape = 'u32[]', space=smem, size = 0x4, offset = 0x4, fixed_abs, tag = 'smem constant byte address 0x4 - core index']
  #allocation1 [shape = 'u32[144,128]{1,0:T(1,128)}', space=vmem, size = 0x12000, scoped, tag = 'internal scratch']
  %s0 = inlined_call_operand.vmem [shape: f32[2,4,256], index: 0, kind: input, shape index: {}]
  %s1 = inlined_call_operand.vmem [shape: f32[256,144], index: 1, kind: input, shape index: {}]
  %s2 = inlined_call_operand.vmem [shape: f32[2,4,144], index: 2, kind: output, shape index: {}]
  %s3 = sld [smem:[#allocation0]]
  $region41: #{adaptive_avg_pool2d_pallas.1} parent=0
    _
  %s5 = ssub.s32 1, %s3
  %s6 = scalar_select 0, %s5, %s3
  loop: start=0, step=1, limit=4
  $region2: #{adaptive_avg_pool2d_pallas.1} parent=0 // loop_pre_header
    _
  $region3: #{adaptive_avg_pool2d_pallas.1} parent=0 // loop_header
    %s8 = sphi 0, %s12
    %p9 = scmp.ge.s32.totalorder %s8, 4
    %s15 = sphi 0, %s27
    %s16 = sphi 0, %s23
    %s17 = sphi 0, %s15
    %s18 = sphi 0, %s16
    %s19 = sphi 0, %s17
    %s20 = sphi 0, %s18
    %s32 = sphi 0, %s34
    %s35 = sphi 0, %s32
    %s36 = sphi 0, %s35
    %s52 = sphi 0, %s36
    %s56 = sphi 0, %s56
    %s58 = sphi 0, %s56
    %s59 = sphi 0, %s58
    %s73 = sphi 0, %s59
    %s81 = sphi 0, %s83
    %s84 = sphi 0, %s81
    %s85 = sphi 0, %s84
    %s101 = sphi 0, %s85
  $region4: #{adaptive_avg_pool2d_pallas.1} parent=0 // loop_header_branch
    %11 = sbr.rel (%p9) target = $region8
  $region5: #{adaptive_avg_pool2d_pallas.1} parent=0 // loop_body
    %s13 = ssub.s32 %s8, 1
    %s14 = ssub.s32 %s8, 2
    %s21 = sadd.s32 1, %s16
    %p22 = scmp.ge.s32.totalorder %s21, 1
    %s23 = scalar_select %p22, 0, %s21
    %s24 = sadd.s32 1, %s15
    %s25 = scalar_select %p22, %s24, %s15
    %p26 = scmp.ge.s32.totalorder %s25, 2
    %s27 = scalar_select %p26, 0, %s25
    %s28 = ssub.s32 %s15, %s27
    %s29 = ssub.s32 %s16, %s23
    %s30 = sor.u32 %s28, %s29
    %p31 = scmp.eq.s32.totalorder %s30, 0
    %s33 = sadd.s32 %s32, 1
    %s34 = scalar_select %p31, %s32, %s33
    %p37 = pneg %p31
    %p38 = scmp.eq.s32.totalorder %s8, 1
    %p39 = por %p37, %p38
    %p40 = scmp.ne.s32.totalorder %s32, %s35
    %p41 = scmp.eq.s32.totalorder %s8, 0
    %p42 = por %p40, %p41
    %p43 = scmp.ne.s32.totalorder %s32, %s35
    %p44 = scmp.eq.s32.totalorder %s13, 1
    %p45 = por %p43, %p44
    %p46 = scmp.ne.s32.totalorder %s35, %s36
    %p47 = scmp.eq.s32.totalorder %s13, 0
    %p48 = por %p46, %p47
    %p49 = scmp.ne.s32.totalorder %s35, %s36
    %p50 = scmp.eq.s32.totalorder %s14, 1
    %p51 = por %p49, %p50
    %p53 = scmp.ne.s32.totalorder %s36, %s52
    %p54 = scmp.eq.s32.totalorder %s14, 0
    %p55 = por %p53, %p54
    %s57 = sadd.s32 %s56, 1
    %p60 = scmp.eq.s32.totalorder %s8, 1
    %p61 = scmp.ne.s32.totalorder %s56, %s58
    %p62 = scmp.eq.s32.totalorder %s8, 0
    %p63 = por %p61, %p62
    %p64 = scmp.ne.s32.totalorder %s56, %s58
    %p65 = scmp.eq.s32.totalorder %s13, 1
    %p66 = por %p64, %p65
    %p67 = scmp.ne.s32.totalorder %s58, %s59
    %p68 = scmp.eq.s32.totalorder %s13, 0
    %p69 = por %p67, %p68
    %p70 = scmp.ne.s32.totalorder %s58, %s59
    %p71 = scmp.eq.s32.totalorder %s14, 1
    %p72 = por %p70, %p71
    %p74 = scmp.ne.s32.totalorder %s59, %s73
    %p75 = scmp.eq.s32.totalorder %s14, 0
    %p76 = por %p74, %p75
    %s77 = ssub.s32 %s15, %s27
    %s78 = ssub.s32 %s16, %s23
    %s79 = sor.u32 %s77, %s78
    %p80 = scmp.eq.s32.totalorder %s79, 0
    %s82 = sadd.s32 %s81, 1
    %s83 = scalar_select %p80, %s81, %s82
    %p86 = pneg %p80
    %p87 = scmp.eq.s32.totalorder %s8, 1
    %p88 = por %p86, %p87
    %p89 = scmp.ne.s32.totalorder %s81, %s84
    %p90 = scmp.eq.s32.totalorder %s8, 0
    %p91 = por %p89, %p90
    %p92 = scmp.ne.s32.totalorder %s81, %s84
    %p93 = scmp.eq.s32.totalorder %s13, 1
    %p94 = por %p92, %p93
    %p95 = scmp.ne.s32.totalorder %s84, %s85
    %p96 = scmp.eq.s32.totalorder %s13, 0
    %p97 = por %p95, %p96
    %p98 = scmp.ne.s32.totalorder %s84, %s85
    %p99 = scmp.eq.s32.totalorder %s14, 1
    %p100 = por %p98, %p99
    %p102 = scmp.ne.s32.totalorder %s85, %s101
    %p103 = scmp.eq.s32.totalorder %s14, 0
    %p104 = por %p102, %p103
    %p105 = scmp.le.s32.totalorder 1, %s8
    %p106 = scmp.lt.s32.totalorder %s8, 3
    %p107 = pnand %p105, %p106
    %p108 = pneg %p107
    // Predicated region
    $region9: #{adaptive_avg_pool2d_pallas.1} parent=5 // pred_check
      _
    $region10: #{adaptive_avg_pool2d_pallas.1} parent=5 // pred_check_branch
      %110 = sbr.rel (%p107) target = $region12
    $region11: #{adaptive_avg_pool2d_pallas.1} parent=5 // pred_region
      %s111 = ssub.s32 %s8, 1
      // Predicated region
      $region13: #{adaptive_avg_pool2d_pallas.1} parent=11 // pred_check
        %p112 = pneg %p69
      $region14: #{adaptive_avg_pool2d_pallas.1} parent=11 // pred_check_branch
        %114 = sbr.rel (%p112) target = $region16
      $region15: #{adaptive_avg_pool2d_pallas.1} parent=11 // pred_region
        _
      $region16: #{adaptive_avg_pool2d_pallas.1} parent=11 // pred_fallthru
        _
    $region12: #{adaptive_avg_pool2d_pallas.1} parent=5 // pred_fallthru
      _
    %p115 = scmp.lt.s32.totalorder %s8, 2
    // Predicated region
    $region17: #{adaptive_avg_pool2d_pallas.1} parent=5 // pred_check
      %p116 = pneg %p115
    $region18: #{adaptive_avg_pool2d_pallas.1} parent=5 // pred_check_branch
      %118 = sbr.rel (%p116) target = $region20
    $region19: #{adaptive_avg_pool2d_pallas.1} parent=5 // pred_region
      // Predicated region
      $region21: #{adaptive_avg_pool2d_pallas.1} parent=19 // pred_check
        %p119 = pneg %p42
      $region22: #{adaptive_avg_pool2d_pallas.1} parent=19 // pred_check_branch
        %121 = sbr.rel (%p119) target = $region24
      $region23: #{adaptive_avg_pool2d_pallas.1} parent=19 // pred_region
        %p122 = scmp.lt.s32.totalorder %s15, 1
        %s123 = scalar_select %p122, %s15, 1
        %p124 = scmp.lt.s32.totalorder %s16, 0
        %s125 = scalar_select %p124, %s16, 0
        %s126 = smul.addr %s125, 2
        %s127 = smul.addr %s123, 2
        %s128 = sadd.s32 %s126, %s127
        %s129 = smul.addr %s128, 4
        %s130 = scalar_lea.vmem %s0, %s129
      $region24: #{adaptive_avg_pool2d_pallas.1} parent=19 // pred_fallthru
        _
    $region20: #{adaptive_avg_pool2d_pallas.1} parent=5 // pred_fallthru
      _
    %p131 = scmp.le.s32.totalorder 1, %s8
    %p132 = scmp.lt.s32.totalorder %s8, 3
    %p133 = pnand %p131, %p132
    %p134 = pneg %p133
    // Predicated region
    $region25: #{adaptive_avg_pool2d_pallas.1} parent=5 // pred_check
      _
    $region26: #{adaptive_avg_pool2d_pallas.1} parent=5 // pred_check_branch
      %136 = sbr.rel (%p133) target = $region28
    $region27: #{adaptive_avg_pool2d_pallas.1} parent=5 // pred_region
      %s137 = ssub.s32 %s8, 1
      %p138 = scmp.lt.s32.totalorder %s17, 1
      %s139 = scalar_select %p138, %s17, 1
      %p140 = scmp.lt.s32.totalorder %s18, 0
      %s141 = scalar_select %p140, %s18, 0
      %s142 = smul.addr %s141, 2
      %s143 = smul.addr %s139, 2
      %s144 = sadd.s32 %s142, %s143
      %s145 = smul.addr %s144, 4
      %s146 = scalar_lea.vmem %s0, %s145
      %p147 = pneg %p48
      %p148 = pneg %p45
      %p149 = pneg %p69
      %p150 = pneg %p66
      %p151 = pneg %p97
      %p152 = pneg %p94
      %p153 = scmp.lt.s32.totalorder %s17, 1
      %s154 = scalar_select %p153, %s17, 1
      %p155 = scmp.lt.s32.totalorder %s18, 0
      %s156 = scalar_select %p155, %s18, 0
      %s157 = smul.addr %s156, 2
      %s158 = smul.addr %s154, 2
      %s159 = sadd.s32 %s157, %s158
      %s160 = smul.addr %s159, 4
      %s161 = scalar_lea.vmem %s2, %s160
      %p162 = scmp.lt.s32.totalorder %s17, 1
      %s163 = scalar_select %p162, %s17, 1
      %p164 = scmp.lt.s32.totalorder %s18, 0
      %s165 = scalar_select %p164, %s18, 0
      %s166 = smul.addr %s165, 2
      %s167 = smul.addr %s163, 2
      %s168 = sadd.s32 %s166, %s167
      %s169 = smul.addr %s168, 4
      %s170 = scalar_lea.vmem %s0, %s169
      %p171 = scmp.lt.s32.totalorder %s17, 1
      %s172 = scalar_select %p171, %s17, 1
      %p173 = scmp.lt.s32.totalorder %s18, 0
      %s174 = scalar_select %p173, %s18, 0
      %s175 = smul.addr %s174, 2
      %s176 = smul.addr %s172, 2
      %s177 = sadd.s32 %s175, %s176
      %s178 = smul.addr %s177, 4
      %s179 = scalar_lea.vmem %s2, %s178
      %v180 = vld [vmem:[%s170] sm:$0xff]
      %v181 = vld [vmem:[%s1] sm:$0xff]
      %v182 = vld [vmem:[%s1 + $0x8] sm:$0xff]
      %v183 = vld [vmem:[%s1 + $0x10] sm:$0xff]
      %v184 = vld [vmem:[%s1 + $0x18] sm:$0xff]
      %v185 = vld [vmem:[%s1 + $0x20] sm:$0xff]
      %v186 = vld [vmem:[%s1 + $0x28] sm:$0xff]
      %v187 = vld [vmem:[%s1 + $0x30] sm:$0xff]
      %v188 = vld [vmem:[%s1 + $0x38] sm:$0xff]
      %v189 = vld [vmem:[%s1 + $0x40] sm:$0xff]
      %v190 = vld [vmem:[%s1 + $0x48] sm:$0xff]
      %v191 = vld [vmem:[%s1 + $0x50] sm:$0xff]
      %v192 = vld [vmem:[%s1 + $0x58] sm:$0xff]
      %v193 = vld [vmem:[%s1 + $0x60] sm:$0xff]
      %v194 = vld [vmem:[%s1 + $0x68] sm:$0xff]
      %v195 = vld [vmem:[%s1 + $0x70] sm:$0xff]
      %v196 = vld [vmem:[%s1 + $0x78] sm:$0xff]
      %v197 = vld [vmem:[%s1 + $0x80] sm:$0xff]
      %v198 = vld [vmem:[%s1 + $0x88] sm:$0xff]
      %v199 = vld [vmem:[%s1 + $0x90] sm:$0xff]
      %v200 = vld [vmem:[%s1 + $0x98] sm:$0xff]
      %v201 = vld [vmem:[%s1 + $0xa0] sm:$0xff]
      %v202 = vld [vmem:[%s1 + $0xa8] sm:$0xff]
      %v203 = vld [vmem:[%s1 + $0xb0] sm:$0xff]
      %v204 = vld [vmem:[%s1 + $0xb8] sm:$0xff]
      %v205 = vld [vmem:[%s1 + $0xc0] sm:$0xff]
      %v206 = vld [vmem:[%s1 + $0xc8] sm:$0xff]
      %v207 = vld [vmem:[%s1 + $0xd0] sm:$0xff]
      %v208 = vld [vmem:[%s1 + $0xd8] sm:$0xff]
      %v209 = vld [vmem:[%s1 + $0xe0] sm:$0xff]
      %v210 = vld [vmem:[%s1 + $0xe8] sm:$0xff]
      %v211 = vld [vmem:[%s1 + $0xf0] sm:$0xff]
      %v212 = vld [vmem:[%s1 + $0xf8] sm:$0xff]
      %v213 = vld [vmem:[%s1 + $0x100] sm:$0xff]
      %v214 = vld [vmem:[%s1 + $0x108] sm:$0xff]
      %v215 = vld [vmem:[%s1 + $0x110] sm:$0xff]
      %v216 = vld [vmem:[%s1 + $0x118] sm:$0xff]
      %v217 = vld [vmem:[%s1 + $0x120] sm:$0xff]
      %v218 = vld [vmem:[%s1 + $0x128] sm:$0xff]
      %v219 = vld [vmem:[%s1 + $0x130] sm:$0xff]
      %v220 = vld [vmem:[%s1 + $0x138] sm:$0xff]
      %v221 = vld [vmem:[%s1 + $0x140] sm:$0xff]
      %v222 = vld [vmem:[%s1 + $0x148] sm:$0xff]
      %v223 = vld [vmem:[%s1 + $0x150] sm:$0xff]
      %v224 = vld [vmem:[%s1 + $0x158] sm:$0xff]
      %v225 = vld [vmem:[%s1 + $0x160] sm:$0xff]
      %v226 = vld [vmem:[%s1 + $0x168] sm:$0xff]
      %v227 = vld [vmem:[%s1 + $0x170] sm:$0xff]
      %v228 = vld [vmem:[%s1 + $0x178] sm:$0xff]
      %v229 = vld [vmem:[%s1 + $0x180] sm:$0xff]
      %v230 = vld [vmem:[%s1 + $0x188] sm:$0xff]
      %v231 = vld [vmem:[%s1 + $0x190] sm:$0xff]
      %v232 = vld [vmem:[%s1 + $0x198] sm:$0xff]
      %v233 = vld [vmem:[%s1 + $0x1a0] sm:$0xff]
      %v234 = vld [vmem:[%s1 + $0x1a8] sm:$0xff]
      %v235 = vld [vmem:[%s1 + $0x1b0] sm:$0xff]
      %v236 = vld [vmem:[%s1 + $0x1b8] sm:$0xff]
      %v237 = vld [vmem:[%s1 + $0x1c0] sm:$0xff]
      %v238 = vld [vmem:[%s1 + $0x1c8] sm:$0xff]
      %v239 = vld [vmem:[%s1 + $0x1d0] sm:$0xff]
      %v240 = vld [vmem:[%s1 + $0x1d8] sm:$0xff]
      %v241 = vld [vmem:[%s1 + $0x1e0] sm:$0xff]
      %v242 = vld [vmem:[%s1 + $0x1e8] sm:$0xff]
      %v243 = vld [vmem:[%s1 + $0x1f0] sm:$0xff]
      %v244 = vld [vmem:[%s1 + $0x1f8] sm:$0xff]
      %v246 = vcombine.high %v180, %v180
      %248 = vmatprep.subr.mxu0 %v182
      %249 = vmatpush1.msra.mxu0 %v181
      %250 = vmatprep.subr.mxu0 %v184
      %251 = vmatpush1.msra.mxu0 %v183
      %252 = vmatprep.subr.mxu0 %v186
      %253 = vmatpush1.msra.mxu0 %v185
      %254 = vmatprep.subr.mxu0 %v188
      %255 = vmatpush1.msra.mxu0 %v187
      %256 = vmatprep.subr.mxu0 %v190
      %257 = vmatpush1.msra.mxu0 %v189
      %258 = vmatprep.subr.mxu0 %v192
      %259 = vmatpush1.msra.mxu0 %v191
      %260 = vmatprep.subr.mxu0 %v194
      %261 = vmatpush1.msra.mxu0 %v193
      %262 = vmatprep.subr.mxu0 %v196
      %263 = vmatpush1.msra.mxu0 %v195
      %264 = vmatprep.subr.mxu0 %v198
      %265 = vmatpush1.msra.mxu0 %v197
      %266 = vmatprep.subr.mxu0 %v200
      %267 = vmatpush1.msra.mxu0 %v199
      %268 = vmatprep.subr.mxu0 %v202
      %269 = vmatpush1.msra.mxu0 %v201
      %270 = vmatprep.subr.mxu0 %v204
      %271 = vmatpush1.msra.mxu0 %v203
      %272 = vmatprep.subr.mxu0 %v206
      %273 = vmatpush1.msra.mxu0 %v205
      %274 = vmatprep.subr.mxu0 %v208
      %275 = vmatpush1.msra.mxu0 %v207
      %276 = vmatprep.subr.mxu0 %v210
      %277 = vmatpush1.msra.mxu0 %v209
      %278 = vmatprep.subr.mxu0 %v212
      %279 = vmatpush1.msra.mxu0 %v211
      %280 = vmatprep.subr.mxu0 %v214
      %281 = vmatpush1.msra.mxu0 %v213
      %282 = vmatprep.subr.mxu0 %v216
      %283 = vmatpush1.msra.mxu0 %v215
      %284 = vmatprep.subr.mxu0 %v218
      %285 = vmatpush1.msra.mxu0 %v217
      %286 = vmatprep.subr.mxu0 %v220
      %287 = vmatpush1.msra.mxu0 %v219
      %288 = vmatprep.subr.mxu0 %v222
      %289 = vmatpush1.msra.mxu0 %v221
      %290 = vmatprep.subr.mxu0 %v224
      %291 = vmatpush1.msra.mxu0 %v223
      %292 = vmatprep.subr.mxu0 %v226
      %293 = vmatpush1.msra.mxu0 %v225
      %294 = vmatprep.subr.mxu0 %v228
      %295 = vmatpush1.msra.mxu0 %v227
      %296 = vmatprep.subr.mxu0 %v230
      %297 = vmatpush1.msra.mxu0 %v229
      %298 = vmatprep.subr.mxu0 %v232
      %299 = vmatpush1.msra.mxu0 %v231
      %300 = vmatprep.subr.mxu0 %v234
      %301 = vmatpush1.msra.mxu0 %v233
      %302 = vmatprep.subr.mxu0 %v236
      %303 = vmatpush1.msra.mxu0 %v235
      %304 = vmatprep.subr.mxu0 %v238
      %305 = vmatpush1.msra.mxu0 %v237
      %306 = vmatprep.subr.mxu0 %v240
      %307 = vmatpush1.msra.mxu0 %v239
      %308 = vmatprep.subr.mxu0 %v242
      %309 = vmatpush1.msra.mxu0 %v241
      %310 = vmatprep.subr.mxu0 %v244
      %311 = vmatpush1.msra.mxu0 %v243
      %312 = vmatprep.mubr.f32.mxu0 %v246
      %313 = vmatmul.mubr.f32.gmra.mrb[0].mxu0 %v180
      %v314 = vpop.f32.mrb[0].mxu0
      %v315 = vadd.f32 0.0, %v314
      %v316 = vpop.f32.mrb[0].mxu0
      %v317 = vadd.f32 0.0, %v316
      %318 = vdwg.mxu0
      %v321 = vcombine.low %v315, %v317
      %vm323 = vcmask 1043456
      %vm324 = vcmask 130052
      %vm325 = vmor %vm324, %vm323
      %326 = vst.msk [vmem:[%s179] sm:$0xff] %vm325, %v321
      %p327 = scmp.lt.s32.totalorder %s17, 1
      %s328 = scalar_select %p327, %s17, 1
      %p329 = scmp.lt.s32.totalorder %s18, 0
      %s330 = scalar_select %p329, %s18, 0
      %s331 = smul.addr %s330, 2
      %s332 = smul.addr %s328, 2
      %s333 = sadd.s32 %s331, %s332
      %s334 = smul.addr %s333, 4
      %s335 = scalar_lea.vmem %s2, %s334
      // Predicated region
      $region29: #{adaptive_avg_pool2d_pallas.1} parent=27 // pred_check
        %p336 = pneg %p94
      $region30: #{adaptive_avg_pool2d_pallas.1} parent=27 // pred_check_branch
        %338 = sbr.rel (%p336) target = $region32
      $region31: #{adaptive_avg_pool2d_pallas.1} parent=27 // pred_region
        _
      $region32: #{adaptive_avg_pool2d_pallas.1} parent=27 // pred_fallthru
        _
    $region28: #{adaptive_avg_pool2d_pallas.1} parent=5 // pred_fallthru
      _
    %p339 = scmp.le.s32.totalorder 2, %s8
    // Predicated region
    $region33: #{adaptive_avg_pool2d_pallas.1} parent=5 // pred_check
      %p340 = pneg %p339
    $region34: #{adaptive_avg_pool2d_pallas.1} parent=5 // pred_check_branch
      %342 = sbr.rel (%p340) target = $region36
    $region35: #{adaptive_avg_pool2d_pallas.1} parent=5 // pred_region
      %s343 = ssub.s32 %s8, 2
      // Predicated region
      $region37: #{adaptive_avg_pool2d_pallas.1} parent=35 // pred_check
        %p344 = pneg %p100
      $region38: #{adaptive_avg_pool2d_pallas.1} parent=35 // pred_check_branch
        %346 = sbr.rel (%p344) target = $region40
      $region39: #{adaptive_avg_pool2d_pallas.1} parent=35 // pred_region
        %p347 = scmp.lt.s32.totalorder %s19, 1
        %s348 = scalar_select %p347, %s19, 1
        %p349 = scmp.lt.s32.totalorder %s20, 0
        %s350 = scalar_select %p349, %s20, 0
        %s351 = smul.addr %s350, 2
        %s352 = smul.addr %s348, 2
        %s353 = sadd.s32 %s351, %s352
        %s354 = smul.addr %s353, 4
        %s355 = scalar_lea.vmem %s2, %s354
      $region40: #{adaptive_avg_pool2d_pallas.1} parent=35 // pred_fallthru
        _
    $region36: #{adaptive_avg_pool2d_pallas.1} parent=5 // pred_fallthru
      _
  $region6: #{adaptive_avg_pool2d_pallas.1} parent=0 // loop_footer
    %s12 = sadd.s32 1, %s8
  $region7: #{adaptive_avg_pool2d_pallas.1} parent=0 // loop_footer_branch
    %7 = sbr.rel target = $region3
  $region8: #{adaptive_avg_pool2d_pallas.1} parent=0 // loop_exit
    _

</llo_original>
